<compile_context>
chip_gen: v5e
topology: v5e:2x2
jax: 0.10.0
libtpu: 0.0.40
codegen_flags: <defaults>
</compile_context>

<pallas_src>
import jax
import jax.numpy as jnp
from jax.experimental import pallas as pl
from jax.experimental.pallas import tpu as pltpu


def _copy_kernel(x_ref, o_ref):
    # Straight copy of the current VMEM tile (identity).
    o_ref[...] = x_ref[...]


# itemsize -> minimum sublane tile (sub-32-bit dtypes pack along sublanes).
_MIN_SUBLANES = {4: 8, 2: 16, 1: 32}


def _choose_lanes(n: int) -> int:
    """Largest lane-dense width (multiple of 128) dividing n; prefer widths
    that also leave the row count a multiple of 8 (full vregs). 0 => pad."""
    candidates = (4096, 2048, 1024, 512, 256, 128)
    for lanes in candidates:
        if n % lanes == 0 and (n // lanes) % 8 == 0:
            return lanes
    for lanes in candidates:
        if n % lanes == 0:
            return lanes
    return 0


def _pallas_identity(x: jax.Array) -> jax.Array:
    """Identity via a lane-dense, byte-tiled Pallas copy whose output aliases
    the staged input buffer."""
    orig_shape = x.shape
    n = x.size
    if n == 0:
        return x

    flat = x.reshape(-1)
    lanes = _choose_lanes(n)
    padded_n = n
    if lanes == 0:  # ragged element count: pad up to a lane-dense multiple
        lanes = 512
        padded_n = pl.cdiv(n, lanes) * lanes
        flat = jnp.pad(flat, (0, padded_n - n))
    rows = padded_n // lanes
    x2d = flat.reshape(rows, lanes)

    itemsize = jnp.dtype(x.dtype).itemsize
    min_rows = _MIN_SUBLANES.get(itemsize, 8)

    # ~1 MiB per block; double-buffered in + out => ~4 MiB VMEM (portable to
    # v5e's 16 MiB scoped default and v7x's 64 MiB physical VMEM).
    target_block_bytes = 1 << 20
    row_bytes = lanes * itemsize
    tile_rows = max(min_rows, (target_block_bytes // row_bytes) // min_rows * min_rows)

    if tile_rows >= rows:
        # Whole array fits in one small block; full-extent block shapes are
        # always legal regardless of (8, 128) divisibility.
        tile_rows = rows
        grid = (1,)
    else:
        grid = (pl.cdiv(rows, tile_rows),)

    # Never donate the caller's own array object (identity semantics: the
    # caller keeps using x afterwards). The staging reshape always produces a
    # fresh intermediate, so this is normally True.
    donate = x2d is not x

    y2d = pl.pallas_call(
        _copy_kernel,
        out_shape=jax.ShapeDtypeStruct((rows, lanes), x.dtype),
        grid_spec=pltpu.PrefetchScalarGridSpec(
            num_scalar_prefetch=0,
            grid=grid,
            in_specs=[pl.BlockSpec((tile_rows, lanes), lambda i: (i, 0))],
            out_specs=pl.BlockSpec((tile_rows, lanes), lambda i: (i, 0)),
        ),
        input_output_aliases=({0: 0} if donate else {}),
        compiler_params=pltpu.CompilerParams(
            dimension_semantics=("parallel",),
        ),
    )(x2d)

    y_flat = y2d.reshape(-1)
    if padded_n != n:
        y_flat = y_flat[:n]
    return y_flat.reshape(orig_shape)


class Flag:
    """JAX/Pallas equivalent of the PyTorch `Flag` nn.Module: print + identity.

    # TODO(synk): the truly optimal forward is `return x` with no kernel at
    # all; the aliased Pallas copy is kept so the forward pass exercises a
    # real pallas_call while moving (essentially) a single HBM stream.
    """

    def __init__(self, msg) -> None:
        self.msg = msg

    def __call__(self, x: jax.Array) -> jax.Array:
        # Host-side print, matching the PyTorch module's per-call print.
        # (Note: under jax.jit this would fire at trace time only.)
        print(f"Layer: {self.msg}")
        return _pallas_identity(x)


if __name__ == "__main__":
    key = jax.random.PRNGKey(0)
    # NCHW input, small shape: batch=2, channels=4, spatial=16x16.
    x = jax.random.normal(key, (2, 4, 16, 16), dtype=jnp.float32)

    flag = Flag("parta2_bbox_head_flag")
    y = flag(x)
    y = jax.block_until_ready(y)

    assert y.shape == x.shape and y.dtype == x.dtype
    assert bool(jnp.all(y == x))
    print("KERNEL_OK")
</pallas_src>

<mosaic_0001>
module attributes {stable_mosaic.version = 11 : i64} {
  func.func @_copy_kernel(%arg0: i32, %arg1: memref<8x256xf32, #tpu.memory_space<vmem>>, %arg2: memref<8x256xf32, #tpu.memory_space<vmem>>) attributes {dimension_semantics = [#tpu.dimension_semantics<parallel>], iteration_bounds = array<i64: 1>, scalar_prefetch = 0 : i64, scratch_operands = 0 : i64, tpu.core_type = #tpu.core_type<tc>, window_params = [{transform_indices = @transform_0, window_bounds = array<i64: 8, 256>}, {transform_indices = @transform_1, window_bounds = array<i64: 8, 256>}]} {
    %c0 = arith.constant 0 : index
    %c0_0 = arith.constant 0 : index
    %0 = vector.load %arg1[%c0, %c0_0] : memref<8x256xf32, #tpu.memory_space<vmem>>, vector<8x256xf32>
    %c0_1 = arith.constant 0 : index
    %c0_2 = arith.constant 0 : index
    %1 = vector.load %arg2[%c0_1, %c0_2] : memref<8x256xf32, #tpu.memory_space<vmem>>, vector<8x256xf32>
    tpu.vector_store %arg2[%c0_1, %c0_2], %0 {strides = array<i32>} : memref<8x256xf32, #tpu.memory_space<vmem>>, vector<8x256xf32>,
    return
  }
  func.func @transform_0(%arg0: i32) -> (i32, i32) {
    %c0_i32 = arith.constant 0 : i32
    %c0_i32_0 = arith.constant 0 : i32
    return %arg0, %c0_i32 : i32, i32
  }
  func.func @transform_1(%arg0: i32) -> (i32, i32) {
    %c0_i32 = arith.constant 0 : i32
    %c0_i32_0 = arith.constant 0 : i32
    return %arg0, %c0_i32 : i32, i32
  }
}

</mosaic_0001>

<llo_original>
// kernel: tpu_custom_call.1
$region0: #{tpu_custom_call.1}
  #allocation0 [shape = 'u32[]', space=smem, size = 0x4, offset = 0x4, fixed_abs, tag = 'smem constant byte address 0x4 - core index']
  #allocation1 [shape = 'u32[72,128]{1,0:T(1,128)}', space=vmem, size = 0x9000, scoped, tag = 'internal scratch']
  %s0 = inlined_call_operand.hbm [shape: f32[8,256], index: 0, kind: input, shape index: {}, may-alias: {0,1}]
  %s1 = inlined_call_operand.hbm [shape: f32[8,256], index: 1, kind: output, shape index: {}, may-alias: {0,1}]
  %s2 = sld [smem:[#allocation0]]
  $region18: #{tpu_custom_call.1} parent=0
    _
  %s4 = ssub.s32 1, %s2
  %s5 = scalar_select 0, %s4, %s2
  $region1: #{tpu_custom_call.1} parent=0
    #allocation2 [shape = 'u8[8192]{0}', space=vmem, size = 0x2000, scoped, tag = 'input window, operand 0, single buffered']
    #allocation3 [shape = 's32[1]{0}', space=sflag, size = 0x4, scoped, tag = 'scoped memory for tpu_custom_call.1']
    #allocation4 [shape = 's32[1]{0}', space=sflag, size = 0x4, scoped, tag = 'scoped memory for tpu_custom_call.1']
    #allocation5 [shape = 'u8[8192]{0}', space=vmem, size = 0x2000, scoped, tag = 'output window, operand 0, single buffered']
    %6 = vsyncpa [#allocation3], 0
    %7 = vsyncpa [#allocation4], 0
    // Predicated region
    $region2: #{tpu_custom_call.1} parent=1 // pred_check
      _
    $region3: #{tpu_custom_call.1} parent=1 // pred_check_branch
      %9 = sbr.rel (0) target = $region5
    $region4: #{tpu_custom_call.1} parent=1 // pred_region
      %11 = vsyncadd [#allocation3], 0
      %s13 = sshll.u32 %s0, 4
      %s14 = int_to_ptr.hbm [resolvable:$true] %s13
      %s15 = sshll.u32 [#allocation2], 4
      %s16 = int_to_ptr.vmem [resolvable:$true] %s15
      %18 = dma.hbm_to_vmem [thread:$0]  %s14, 256, %s16, [#allocation3]
    $region5: #{tpu_custom_call.1} parent=1 // pred_fallthru
      _
    // Predicated region
    $region6: #{tpu_custom_call.1} parent=1 // pred_check
      _
    $region7: #{tpu_custom_call.1} parent=1 // pred_check_branch
      %20 = sbr.rel (0) target = $region9
    $region8: #{tpu_custom_call.1} parent=1 // pred_region
      %22 = dma.done [#allocation3], 256
    $region9: #{tpu_custom_call.1} parent=1 // pred_fallthru
      _
    %v23 = vld [vmem:[#allocation2] sm:$0xff]
    %v24 = vld [vmem:[#allocation2 + $0x8] sm:$0xff]
    %25 = vst [vmem:[#allocation5] sm:$0xff] %v23
    %26 = vst [vmem:[#allocation5 + $0x8] sm:$0xff] %v24
    // Predicated region
    $region10: #{tpu_custom_call.1} parent=1 // pred_check
      _
    $region11: #{tpu_custom_call.1} parent=1 // pred_check_branch
      %28 = sbr.rel (0) target = $region13
    $region12: #{tpu_custom_call.1} parent=1 // pred_region
      %30 = vsyncadd [#allocation4], 0
      %s32 = sshll.u32 [#allocation5], 4
      %s33 = int_to_ptr.vmem [resolvable:$true] %s32
      %s34 = sshll.u32 %s1, 4
      %s35 = int_to_ptr.hbm [resolvable:$true] %s34
      %37 = dma.vmem_to_hbm [thread:$0]  %s33, 256, %s35, [#allocation4]
    $region13: #{tpu_custom_call.1} parent=1 // pred_fallthru
      _
    // Predicated region
    $region14: #{tpu_custom_call.1} parent=1 // pred_check
      _
    $region15: #{tpu_custom_call.1} parent=1 // pred_check_branch
      %39 = sbr.rel (0) target = $region17
    $region16: #{tpu_custom_call.1} parent=1 // pred_region
      %41 = dma.done [#allocation4], 256
    $region17: #{tpu_custom_call.1} parent=1 // pred_fallthru
      _
    %42 = vsyncpa [#allocation3], 1
    %43 = vsyncpa [#allocation4], 1

</llo_original>
